<compile_context>
chip_gen: v6e
topology: v6e:2x2x1
jax: 0.10.0
libtpu: 0.0.40
codegen_flags: <defaults>
</compile_context>

<pallas_src>
import functools

import jax
import jax.numpy as jnp
from jax.experimental import pallas as pl
from jax.experimental.pallas import tpu as pltpu

_SLAB_WIDTHS = (1024, 512, 256, 128)      # lane-dense candidate widths (mult. of 128)
_TARGET_BLOCK_BYTES = 4 * 1024 * 1024     # per-buffer block budget; double-buffered
                                          # in+out ~16 MiB -> safe on v7x's 64 MiB VMEM
_SINGLE_BLOCK_BYTES = 1 * 1024 * 1024     # above this force >=2 blocks so v7x's two
                                          # TensorCores can both work on the grid
_SUPPORTED = ("ReLU", "Sigmoid", "Tanh", "GELU")
_FLOPS_PER_ELEM = {"ReLU": 1, "Sigmoid": 4, "Tanh": 2, "GELU": 14}
_TRANS_PER_ELEM = {"ReLU": 0, "Sigmoid": 1, "Tanh": 1, "GELU": 1}


def _round_up(a: int, b: int) -> int:
    return ((a + b - 1) // b) * b


def _erf_f32(x):
    """erf via Abramowitz & Stegun 7.1.26 (max abs err ~1.5e-7, i.e. f32-level).

    Built only from ops with guaranteed Pallas/Mosaic lowerings
    (abs / exp / mul / add / where), so no dependence on an erf primitive.
    """
    a1, a2, a3, a4, a5 = (0.254829592, -0.284496736, 1.421413741,
                          -1.453152027, 1.061405429)
    p = 0.3275911
    ax = jnp.abs(x)
    t = 1.0 / (1.0 + p * ax)
    poly = t * (a1 + t * (a2 + t * (a3 + t * (a4 + t * a5))))
    y = 1.0 - poly * jnp.exp(-ax * ax)
    return jnp.where(x >= 0.0, y, -y)


def _act_math(x, func: str):
    """Elementwise activation math, usable both inside the Pallas kernel and
    (for the rare <128-element ragged tail) as a plain jnp op."""
    if func == "ReLU":
        return jnp.maximum(x, 0)
    if func == "Sigmoid":
        # EUP logistic; native dtype (bf16 EUP path on v6e/v7x, widened on v5e).
        return jax.nn.sigmoid(x)
    if func == "Tanh":
        # EUP tanh; native dtype.
        return jnp.tanh(x)
    if func == "GELU":
        # torch.nn.GELU default = exact erf form; erf polynomial needs f32.
        xf = x.astype(jnp.float32)
        y = 0.5 * xf * (1.0 + _erf_f32(xf * 0.7071067811865476))
        return y.astype(x.dtype)
    raise ValueError(f"{func} is not a supported activation")


# ----------------------------------------------------------------------------
# Pallas kernel: elementwise activation (the nn.Module that
# BaseModel._build_activation_function would have produced).
# ----------------------------------------------------------------------------
def _activation_kernel(x_ref, o_ref, *, func: str):
    o_ref[...] = _act_math(x_ref[...], func).astype(o_ref.dtype)


def _run_slab(x2d: jax.Array, func: str) -> jax.Array:
    """Apply the activation to a lane-dense (rows, cols) slab via pallas_call."""
    rows, cols = x2d.shape
    dtype = x2d.dtype
    itemsize = jnp.dtype(dtype).itemsize
    # Layout-native sublane: 4-byte -> 8, 2-byte -> 16, 1-byte (int8/fp8) -> 32.
    sublane = 32 if itemsize == 1 else (16 if itemsize == 2 else 8)
    nbytes = rows * cols * itemsize

    if nbytes <= _SINGLE_BLOCK_BYTES:
        # One full-array block (block_shape == array dims -> (8,128) rule exempt).
        tile_rows = rows
    else:
        # Tile rows from the VMEM byte budget, but force >= 2 blocks so the
        # "parallel" grid axis can be sharded across v7x's 2 TensorCores.
        budget_rows = max(
            sublane,
            (_TARGET_BLOCK_BYTES // (itemsize * cols)) // sublane * sublane)
        half_rows = _round_up(pl.cdiv(rows, 2), sublane)
        tile_rows = max(sublane, min(budget_rows, half_rows))
    grid = (pl.cdiv(rows, tile_rows),)  # ragged last block is masked by Pallas

    block_bytes = tile_rows * cols * itemsize
    cost = pl.CostEstimate(
        flops=_FLOPS_PER_ELEM[func] * rows * cols,
        transcendentals=_TRANS_PER_ELEM[func] * rows * cols,
        bytes_accessed=2 * rows * cols * itemsize)

    return pl.pallas_call(
        functools.partial(_activation_kernel, func=func),
        out_shape=jax.ShapeDtypeStruct((rows, cols), dtype),
        grid=grid,
        in_specs=[pl.BlockSpec((tile_rows, cols), lambda i: (i, 0))],
        out_specs=pl.BlockSpec((tile_rows, cols), lambda i: (i, 0)),
        compiler_params=pltpu.CompilerParams(
            dimension_semantics=("parallel",),
            # Derived from the actual footprint (2 bufs x (in+out) x block) plus
            # slack; stays well under v7x's 64 MiB VMEM while covering v5e/v6e.
            vmem_limit_bytes=max(32 * 1024 * 1024,
                                 4 * block_bytes + 4 * 1024 * 1024)),
        cost_estimate=cost,
    )(x2d)


def _build_activation_function(func: str):
    """Pallas analogue of BaseModel._build_activation_function.

    Returns a callable applying the named activation elementwise to an
    arbitrary-shaped float array via a tiled, lane-dense Pallas TPU kernel.
    """
    if func not in _SUPPORTED:
        raise ValueError(f"{func} is not part of nn.Module (supported: {_SUPPORTED})")

    @jax.jit
    def apply(x: jax.Array) -> jax.Array:
        orig_shape, dtype = x.shape, x.dtype
        total = x.size
        if total == 0:
            return x
        itemsize = jnp.dtype(dtype).itemsize
        flat = x.reshape(-1)  # row-major flatten: layout-preserving, no HBM copy

        # Adaptive lane-dense width: widest of {1024,...,128} dividing total.
        cols = next((c for c in _SLAB_WIDTHS if total % c == 0), None)
        if cols is not None:
            # Common DL case: zero pad, zero slice around the custom call.
            out2d = _run_slab(flat.reshape(total // cols, cols), func)
            return out2d.reshape(orig_shape)

        if total * itemsize <= _SINGLE_BLOCK_BYTES:
            # Small ragged input: minimal pad to (cdiv(total,128), 128), single
            # full-array block, slice back.  Copy cost is negligible at this size.
            rows = pl.cdiv(total, 128)
            flat_p = jnp.pad(flat, (0, rows * 128 - total))
            out = _run_slab(flat_p.reshape(rows, 128), func).reshape(-1)[:total]
            return out.reshape(orig_shape)

        # Rare: large AND not a multiple of 128.  Run the kernel on the
        # 128-aligned prefix and compute the <128-element tail with the same
        # math in plain jnp — avoids padding/slicing the whole array around the
        # (unfusable) custom call.
        prefix = (total // 128) * 128
        head = _run_slab(flat[:prefix].reshape(prefix // 128, 128), func).reshape(-1)
        tail = _act_math(flat[prefix:], func)
        return jnp.concatenate([head, tail]).reshape(orig_shape)

    return apply


# ----------------------------------------------------------------------------
# BaseModel (JAX/Pallas version).  Abstract structure preserved; the concrete
# forward path applies the built activation elementwise via the Pallas kernel.
# ----------------------------------------------------------------------------
class BaseModel:
    def __init__(self, activation: str = "ReLU") -> None:
        # The PyTorch BaseModel.__init__ declares no learnable parameters.
        self._activation_name = activation
        self._activation = _build_activation_function(activation)

    # ---- abstract in the original; left as stubs -------------------------
    def _build_encoder(self):       # TODO(synk): abstract in BaseModel
        raise NotImplementedError

    def _build_decoder(self):       # TODO(synk): abstract in BaseModel
        raise NotImplementedError

    def _build_middle_block(self):  # TODO(synk): abstract in BaseModel
        raise NotImplementedError

    def _calculate_features(self):  # TODO(synk): abstract in BaseModel
        raise NotImplementedError

    def encode(self, x):            # TODO(synk): abstract in BaseModel
        raise NotImplementedError

    def decode(self, x):            # TODO(synk): abstract in BaseModel
        raise NotImplementedError

    # TODO(synk): load_model_from_state_dict loads a .pt checkpoint — no
    # Pallas equivalent; (non-existent) parameters are built in-script.

    # ---- concrete compute path -------------------------------------------
    def forward(self, x: jax.Array) -> jax.Array:
        """Applies the built activation elementwise (shape/dtype preserved)."""
        return self._activation(x)

    def reconstruct(self, test_data: jax.Array) -> jax.Array:
        # torch.no_grad() has no effect in this inference-only JAX path.
        return self.forward(test_data)

    def __call__(self, x):
        return self.forward(x)


if __name__ == "__main__":
    key = jax.random.PRNGKey(0)
    x = jax.random.normal(key, (2, 4, 16, 16), dtype=jnp.float32)  # NCHW

    # ReLU path (zero pad / zero slice, single full-array block).
    model = BaseModel(activation="ReLU")
    y = jax.block_until_ready(model.reconstruct(x))
    assert y.shape == x.shape and y.dtype == x.dtype
    assert jnp.allclose(y, jnp.maximum(x, 0.0), atol=1e-6), "ReLU mismatch"

    # GELU path (exact erf form, matching torch.nn.GELU default).
    gelu_model = BaseModel(activation="GELU")
    yg = jax.block_until_ready(gelu_model(x))
    assert jnp.allclose(yg, jax.nn.gelu(x, approximate=False), atol=1e-5), "GELU mismatch"

    # Small ragged total (not a multiple of 128): single-block pad/slice path.
    x_odd = jax.random.normal(jax.random.PRNGKey(1), (2, 3, 5, 7), dtype=jnp.float32)
    y_odd = jax.block_until_ready(model(x_odd))
    assert jnp.allclose(y_odd, jnp.maximum(x_odd, 0.0), atol=1e-6), "ragged mismatch"

    # >1 MiB and lane-aligned: multi-block grid (>=2 blocks for v7x's 2 TCs).
    x_big = jax.random.normal(jax.random.PRNGKey(2), (8, 32, 64, 32), dtype=jnp.float32)
    y_big = jax.block_until_ready(model(x_big))
    assert jnp.allclose(y_big, jnp.maximum(x_big, 0.0), atol=1e-6), "multi-block mismatch"

    # >1 MiB and NOT a multiple of 128: aligned-prefix kernel + tiny jnp tail.
    tanh_model = BaseModel(activation="Tanh")
    x_rag = jax.random.normal(jax.random.PRNGKey(3), (3, 7, 113, 127), dtype=jnp.float32)
    y_rag = jax.block_until_ready(tanh_model(x_rag))
    assert jnp.allclose(y_rag, jnp.tanh(x_rag), atol=1e-5), "prefix/tail mismatch"

    print("KERNEL_OK")
</pallas_src>

<mosaic_0001>
module attributes {stable_mosaic.version = 11 : i64} {
  func.func @_activation_kernel(%arg0: i32, %arg1: memref<2x1024xf32, #tpu.memory_space<vmem>>, %arg2: memref<2x1024xf32, #tpu.memory_space<vmem>>) attributes {dimension_semantics = [#tpu.dimension_semantics<parallel>], iteration_bounds = array<i64: 1>, scalar_prefetch = 0 : i64, scratch_operands = 0 : i64, tpu.core_type = #tpu.core_type<tc>, window_params = [{transform_indices = @transform_0, window_bounds = array<i64: 2, 1024>}, {transform_indices = @transform_1, window_bounds = array<i64: 2, 1024>}]} {
    %c0 = arith.constant 0 : index
    %c0_0 = arith.constant 0 : index
    %0 = vector.load %arg1[%c0, %c0_0] : memref<2x1024xf32, #tpu.memory_space<vmem>>, vector<2x1024xf32>
    %cst = arith.constant 0.000000e+00 : f32
    %1 = vector.broadcast %cst : f32 to vector<2x1024xf32>
    %2 = arith.maximumf %0, %1 : vector<2x1024xf32>
    %c0_1 = arith.constant 0 : index
    %c0_2 = arith.constant 0 : index
    %3 = vector.load %arg2[%c0_1, %c0_2] : memref<2x1024xf32, #tpu.memory_space<vmem>>, vector<2x1024xf32>
    tpu.vector_store %arg2[%c0_1, %c0_2], %2 {strides = array<i32>} : memref<2x1024xf32, #tpu.memory_space<vmem>>, vector<2x1024xf32>,
    return
  }
  func.func @transform_0(%arg0: i32) -> (i32, i32) {
    %c0_i32 = arith.constant 0 : i32
    %c0_i32_0 = arith.constant 0 : i32
    return %arg0, %c0_i32 : i32, i32
  }
  func.func @transform_1(%arg0: i32) -> (i32, i32) {
    %c0_i32 = arith.constant 0 : i32
    %c0_i32_0 = arith.constant 0 : i32
    return %arg0, %c0_i32 : i32, i32
  }
}

</mosaic_0001>

<llo_original>
// kernel: apply.1
$region0: #{apply.1}
  #allocation0 [shape = 'u32[]', space=smem, size = 0x4, offset = 0x4, fixed_abs, tag = 'smem constant byte address 0x4 - core index']
  #allocation1 [shape = 'u32[144,128]{1,0:T(1,128)}', space=vmem, size = 0x12000, scoped, tag = 'internal scratch']
  %s0 = inlined_call_operand.vmem [shape: f32[2,1024], index: 0, kind: input, shape index: {}]
  %s1 = inlined_call_operand.vmem [shape: f32[2,1024], index: 1, kind: output, shape index: {}]
  %s2 = sld [smem:[#allocation0]]
  $region14: #{apply.1} parent=0
    _
  %s4 = ssub.s32 1, %s2
  %s5 = scalar_select 0, %s4, %s2
  // Predicated region
  $region2: #{apply.1} parent=0 // pred_check
    _
  $region3: #{apply.1} parent=0 // pred_check_branch
    %7 = sbr.rel (0) target = $region5
  $region4: #{apply.1} parent=0 // pred_region
    _
  $region5: #{apply.1} parent=0 // pred_fallthru
    _
  %v8 = vld [vmem:[%s0] sm:$0xff]
  %v9 = vld [vmem:[%s0 + $0x8] sm:$0xff]
  %v10 = vmax.f32 %v8, 0.0
  %v11 = vmax.f32 %v9, 0.0
  %12 = vst [vmem:[%s1] sm:$0xff] %v10
  %13 = vst [vmem:[%s1 + $0x8] sm:$0xff] %v11
  // Predicated region
  $region6: #{apply.1} parent=0 // pred_check
    _
  $region7: #{apply.1} parent=0 // pred_check_branch
    %15 = sbr.rel (0) target = $region9
  $region8: #{apply.1} parent=0 // pred_region
    _
  $region9: #{apply.1} parent=0 // pred_fallthru
    _
  // Predicated region
  $region10: #{apply.1} parent=0 // pred_check
    _
  $region11: #{apply.1} parent=0 // pred_check_branch
    %17 = sbr.rel (0) target = $region13
  $region12: #{apply.1} parent=0 // pred_region
    _
  $region13: #{apply.1} parent=0 // pred_fallthru
    _

</llo_original>
